<compile_context>
chip_gen: v6e
topology: v6e:2x2x1
jax: 0.10.0
libtpu: 0.0.40
codegen_flags: <defaults>
</compile_context>

<pallas_src>
import functools

import jax
import jax.numpy as jnp
from jax import lax
from jax.experimental import pallas as pl
from jax.experimental.pallas import tpu as pltpu

NEG_BIG = -9e15  # same "zero_vec" constant used by the dense pyGAT layer
VMEM_LIMIT = 48 * 1024 * 1024


def _pick_tile(n_pad, d_aug, budget_bytes=40 * 1024 * 1024):
    """Largest row tile (512/256/128) that divides n_pad, fits a conservative
    per-step VMEM estimate, and (when possible) yields >= 2 grid steps so the
    parallel axis can shard across v7x's two TensorCores."""
    resident = 4 * n_pad * d_aug                 # ~2 buffered copies of bf16 Wh
    fallback = None
    for t in (512, 256, 128):
        if n_pad % t:
            continue
        est = 16 * t * n_pad + resident          # int8 bias x2 + f32 bias + e/p temps
        if est > budget_bytes:
            continue
        if n_pad // t >= 2:
            return t
        if fallback is None:
            fallback = t
    return fallback if fallback is not None else 128


def _elu(v):
    """ELU with a cancellation-safe expm1 (series for tiny |v|, exp(v)-1 otherwise)."""
    vn = jnp.minimum(v, 0.0)
    em1 = jnp.where(vn > -1e-3,
                    vn * (1.0 + 0.5 * vn * (1.0 + vn / 3.0)),  # expm1 series
                    jnp.exp(vn) - 1.0)
    return jnp.where(v > 0, v, em1)


# --------------------------------------------------------------------------
# Kernel 1: projection.  Per row tile:
#   Wh_aug  = x_aug @ W_aug            [TILE_N, D_aug]  (per-head ones column built in)
#   e_src   = Wh_aug @ Asrc            [TILE_N, G]
#   e_dst^T = AdstT (x) Wh_aug         [G, TILE_N]      (contract over D_aug)
# Wh_aug is stored in bf16 (MXU-ready for the attention kernel).
# --------------------------------------------------------------------------
def _proj_kernel(x_ref, w_ref, asrc_ref, adstT_ref, wh_ref, esrc_ref, edstT_ref):
    Wh = jnp.dot(x_ref[...], w_ref[...], preferred_element_type=jnp.float32)
    esrc_ref[...] = jnp.dot(Wh, asrc_ref[...], preferred_element_type=jnp.float32)
    edstT_ref[...] = lax.dot_general(adstT_ref[...], Wh,
                                     (((1,), (1,)), ((), ())),
                                     preferred_element_type=jnp.float32)
    wh_ref[...] = Wh.astype(wh_ref.dtype)


def _project(x, W, Asrc, AdstT, tile_n):
    N, F = x.shape
    D = W.shape[1]
    G = Asrc.shape[1]
    return pl.pallas_call(
        _proj_kernel,
        out_shape=(jax.ShapeDtypeStruct((N, D), jnp.bfloat16),
                   jax.ShapeDtypeStruct((N, G), jnp.float32),
                   jax.ShapeDtypeStruct((G, N), jnp.float32)),
        grid_spec=pltpu.PrefetchScalarGridSpec(
            num_scalar_prefetch=0,
            grid=(N // tile_n,),
            in_specs=[
                pl.BlockSpec((tile_n, F), lambda i: (i, 0)),   # x row tile
                pl.BlockSpec((F, D), lambda i: (0, 0)),        # W (resident)
                pl.BlockSpec((D, G), lambda i: (0, 0)),        # Asrc (resident)
                pl.BlockSpec((G, D), lambda i: (0, 0)),        # Adst^T (resident)
            ],
            out_specs=[
                pl.BlockSpec((tile_n, D), lambda i: (i, 0)),
                pl.BlockSpec((tile_n, G), lambda i: (i, 0)),
                pl.BlockSpec((G, tile_n), lambda i: (0, i)),
            ],
        ),
        compiler_params=pltpu.CompilerParams(
            dimension_semantics=("parallel",),
            vmem_limit_bytes=VMEM_LIMIT),
    )(x, W, Asrc, AdstT)


# --------------------------------------------------------------------------
# Kernel 2: masked-softmax attention + aggregation for ALL heads of one layer,
# one row tile per grid step.  Optionally fuses the outer ELU + log_softmax.
# wh_ref holds the per-head [Wh_h | 1] layout, so att@wh gives numerator AND
# softmax denominator from one matmul (exact normalization afterwards).
# --------------------------------------------------------------------------
def _attn_kernel(wh_ref, esrc_ref, edstT_ref, nonedge_ref, out_ref, *,
                 nheads, head_dim, alpha, concat, final_log_softmax):
    # Additive mask bias, materialized once per row tile and reused by all heads.
    bias = nonedge_ref[...].astype(jnp.float32) * NEG_BIG          # [T, N]
    hd1 = head_dim + 1
    for h in range(nheads):                                        # nheads is small & static
        # e[i,j] = LeakyReLU(e_src[i] + e_dst[j]) + mask_bias  (fused VPU pass)
        e = esrc_ref[:, h:h + 1] + edstT_ref[h:h + 1, :]           # [T, N] broadcast add
        e = jnp.maximum(e, alpha * e) + bias                       # LeakyReLU via max
        m = jnp.max(e, axis=1, keepdims=True)
        p = jnp.exp((e - m).astype(jnp.bfloat16))                  # bf16 exp, MXU-ready
        wh_h = wh_ref[:, h * hd1:(h + 1) * hd1]                    # [N, H+1] bf16 (|1 col)
        agg = jnp.dot(p, wh_h, preferred_element_type=jnp.float32)  # [T, H+1]
        res = agg[:, :head_dim] / agg[:, head_dim:head_dim + 1]    # exact softmax norm
        if concat:
            res = _elu(res)                                        # per-head ELU (concat=True)
        if final_log_softmax:
            res = _elu(res)                                        # F.elu(self.out_att(...))
            mx = jnp.max(res, axis=1, keepdims=True)
            z = res - mx
            res = z - jnp.log(jnp.sum(jnp.exp(z), axis=1, keepdims=True))
        out_ref[:, h * head_dim:(h + 1) * head_dim] = res.astype(out_ref.dtype)
    if concat:
        # trailing ones column: pre-augments the inter-layer activation so the
        # next layer's projection emits its own ones column for free.
        out_ref[:, nheads * head_dim:nheads * head_dim + 1] = jnp.ones(
            (out_ref.shape[0], 1), out_ref.dtype)


def _attend(Wh, e_src, e_dstT, nonedge, *, nheads, head_dim, alpha, concat,
            final_log_softmax, tile_n, out_dim, out_dtype):
    N, D = Wh.shape
    G = e_src.shape[1]
    kernel = functools.partial(_attn_kernel, nheads=nheads, head_dim=head_dim,
                               alpha=alpha, concat=concat,
                               final_log_softmax=final_log_softmax)
    return pl.pallas_call(
        kernel,
        out_shape=jax.ShapeDtypeStruct((N, out_dim), out_dtype),
        grid_spec=pltpu.PrefetchScalarGridSpec(
            num_scalar_prefetch=0,
            grid=(N // tile_n,),
            in_specs=[
                pl.BlockSpec((N, D), lambda i: (0, 0)),        # Wh (resident, bf16)
                pl.BlockSpec((tile_n, G), lambda i: (i, 0)),   # e_src rows
                pl.BlockSpec((G, N), lambda i: (0, 0)),        # e_dst^T (resident)
                pl.BlockSpec((tile_n, N), lambda i: (i, 0)),   # int8 non-edge rows
            ],
            out_specs=pl.BlockSpec((tile_n, out_dim), lambda i: (i, 0)),
        ),
        compiler_params=pltpu.CompilerParams(
            dimension_semantics=("parallel",),
            vmem_limit_bytes=VMEM_LIMIT),
    )(Wh, e_src, e_dstT, nonedge)


# --------------------------------------------------------------------------
# Parameter plumbing + forward
# --------------------------------------------------------------------------
def _block_diag_attn_aug(a_vecs):
    """a_vecs [G, H] -> [G*(H+1), G]; head g's vector in rows g*(H+1):g*(H+1)+H
    of column g, zero in the per-head ones-column row."""
    G, H = a_vecs.shape
    a_pad = jnp.concatenate([a_vecs, jnp.zeros((G, 1), a_vecs.dtype)], axis=1)
    eye = jnp.eye(G, dtype=a_vecs.dtype)
    return (a_pad[:, :, None] * eye[:, None, :]).reshape(G * (H + 1), G)


def adgat_forward(params, x, adj, linkpred, th1, th2, alpha):
    N, F = x.shape
    nheads, _, H = params["W_heads"].shape
    C = params["W_out"].shape[1]

    # Pad node count to a lane-friendly multiple of 128; pad rows are fully
    # masked out and sliced off at the end.
    N_pad = ((N + 127) // 128 * 128)
    pad = N_pad - N

    # TODO(synk): GraphAttentionLayer source was not provided; th1/th2/linkpred
    # are assumed to refine the adjacency (keep existing edges whose link score
    # >= th1, add new edges whose score >= th2). Attention itself follows the
    # standard dense pyGAT formulation.
    keep = ((adj > 0) & (linkpred >= th1)) | (linkpred >= th2)
    # int8 non-edge mask (1 byte/elem HBM stream); expanded to an additive
    # -9e15 bias inside the kernel.  Self-loops guarantee >=1 edge per row, so
    # the additive form matches where(mask, e, NEG_BIG) after softmax.
    nonedge = jnp.pad(~keep, ((0, pad), (0, pad)),
                      constant_values=True).astype(jnp.int8)

    # dropout(x) / dropout(attention) are training-only -> no-ops at eval.

    # ---- multi-head layer (concat=True) ----
    # Augment x with a constant-1 feature and W with a unit column per head so
    # Wh_aug = [Wh_h | 1]_h: the ones column lets the aggregation matmul emit
    # the softmax denominator for free.
    x_aug = jnp.pad(x, ((0, pad), (0, 0)))
    x_aug = jnp.concatenate([x_aug, jnp.ones((N_pad, 1), x.dtype)], axis=1)  # [N_pad, F+1]

    D1 = nheads * (H + 1)
    W_aug = jnp.zeros((F + 1, nheads, H + 1), jnp.float32)
    W_aug = W_aug.at[:F, :, :H].set(jnp.transpose(params["W_heads"], (1, 0, 2)))
    W_aug = W_aug.at[F, :, H].set(1.0)
    W_aug = W_aug.reshape(F + 1, D1)

    Asrc = _block_diag_attn_aug(params["a_heads"][:, 0, :])        # [D1, nheads]
    AdstT = _block_diag_attn_aug(params["a_heads"][:, 1, :]).T     # [nheads, D1]

    tile_n = _pick_tile(N_pad, D1)

    Wh, e_src, e_dstT = _project(x_aug, W_aug, Asrc, AdstT, tile_n)
    h_aug = _attend(Wh, e_src, e_dstT, nonedge, nheads=nheads, head_dim=H,
                    alpha=alpha, concat=True, final_log_softmax=False,
                    tile_n=tile_n, out_dim=nheads * H + 1, out_dtype=jnp.bfloat16)

    # ---- output layer (concat=False) fused with ELU + log_softmax(dim=1) ----
    F2 = nheads * H
    W_out_aug = jnp.zeros((F2 + 1, C + 1), jnp.float32)
    W_out_aug = W_out_aug.at[:F2, :C].set(params["W_out"])
    W_out_aug = W_out_aug.at[F2, C].set(1.0)
    W_out_aug = W_out_aug.astype(jnp.bfloat16)                     # bf16 x bf16 MXU

    Asrc_o = jnp.concatenate([params["a_out"][0],
                              jnp.zeros((1,), jnp.float32)])[:, None]   # [C+1, 1]
    AdstT_o = jnp.concatenate([params["a_out"][1],
                               jnp.zeros((1,), jnp.float32)])[None, :]  # [1, C+1]

    Wh_o, e_src_o, e_dstT_o = _project(h_aug, W_out_aug, Asrc_o, AdstT_o, tile_n)
    out = _attend(Wh_o, e_src_o, e_dstT_o, nonedge, nheads=1, head_dim=C,
                  alpha=alpha, concat=False, final_log_softmax=True,
                  tile_n=tile_n, out_dim=C, out_dtype=jnp.float32)
    return out[:N]


def init_params(key, nfeat, nhid, nheads, nclass):
    ks = jax.random.split(key, 4)

    def xavier(k, shape):
        fan_in, fan_out = shape[-2], shape[-1]
        limit = 1.414 * jnp.sqrt(6.0 / (fan_in + fan_out))
        return jax.random.uniform(k, shape, jnp.float32, -limit, limit)

    return {
        "W_heads": xavier(ks[0], (nheads, nfeat, nhid)),
        "a_heads": xavier(ks[1], (nheads, 2, nhid)),
        "W_out": xavier(ks[2], (nheads * nhid, nclass)),
        "a_out": xavier(ks[3], (2, nclass)),
    }


if __name__ == "__main__":
    key = jax.random.PRNGKey(0)
    N, nfeat, nhid, nheads, nclass = 32, 16, 8, 4, 4
    alpha, th1, th2 = 0.2, 0.5, 0.9

    k1, k2, k3, kp = jax.random.split(key, 4)
    x = jax.random.normal(k1, (N, nfeat), jnp.float32)
    adj_rand = jax.random.uniform(k2, (N, N), jnp.float32)
    adj = ((adj_rand + adj_rand.T) > 1.2).astype(jnp.float32)
    adj = jnp.clip(adj + jnp.eye(N, dtype=jnp.float32), 0.0, 1.0)  # self-loops
    linkpred = jax.random.uniform(k3, (N, N), jnp.float32)

    params = init_params(kp, nfeat, nhid, nheads, nclass)

    out = adgat_forward(params, x, adj, linkpred, th1, th2, alpha)
    out = jax.block_until_ready(out)

    assert out.shape == (N, nclass)
    # sanity: rows of log_softmax should exp-sum to ~1
    row_sums = jnp.exp(out).sum(axis=1)
    assert bool(jnp.all(jnp.abs(row_sums - 1.0) < 1e-4))
    print("KERNEL_OK")
</pallas_src>

<mosaic_0001>
module attributes {stable_mosaic.version = 11 : i64} {
  func.func @_proj_kernel(%arg0: i32, %arg1: memref<128x17xf32, #tpu.memory_space<vmem>>, %arg2: memref<17x36xf32, #tpu.memory_space<vmem>>, %arg3: memref<36x4xf32, #tpu.memory_space<vmem>>, %arg4: memref<4x36xf32, #tpu.memory_space<vmem>>, %arg5: memref<128x36xbf16, #tpu.memory_space<vmem>>, %arg6: memref<128x4xf32, #tpu.memory_space<vmem>>, %arg7: memref<4x128xf32, #tpu.memory_space<vmem>>) attributes {dimension_semantics = [#tpu.dimension_semantics<parallel>], iteration_bounds = array<i64: 1>, scalar_prefetch = 0 : i64, scratch_operands = 0 : i64, tpu.core_type = #tpu.core_type<tc>, window_params = [{transform_indices = @transform_0, window_bounds = array<i64: 128, 17>}, {pipeline_mode = #tpu.pipeline_mode<synchronous>, transform_indices = @transform_1, window_bounds = array<i64: 17, 36>}, {pipeline_mode = #tpu.pipeline_mode<synchronous>, transform_indices = @transform_2, window_bounds = array<i64: 36, 4>}, {pipeline_mode = #tpu.pipeline_mode<synchronous>, transform_indices = @transform_3, window_bounds = array<i64: 4, 36>}, {transform_indices = @transform_4, window_bounds = array<i64: 128, 36>}, {transform_indices = @transform_5, window_bounds = array<i64: 128, 4>}, {transform_indices = @transform_6, window_bounds = array<i64: 4, 128>}]} {
    %c0 = arith.constant 0 : index
    %c0_0 = arith.constant 0 : index
    %0 = vector.load %arg1[%c0, %c0_0] : memref<128x17xf32, #tpu.memory_space<vmem>>, vector<128x17xf32>
    %c0_1 = arith.constant 0 : index
    %c0_2 = arith.constant 0 : index
    %1 = vector.load %arg2[%c0_1, %c0_2] : memref<17x36xf32, #tpu.memory_space<vmem>>, vector<17x36xf32>
    %cst = arith.constant dense<0.000000e+00> : vector<128x36xf32>
    %2 = tpu.matmul %0, %1, %cst {dimension_numbers = #tpu.dot_dimension_numbers<[1], [0], [0], [1], [0, 0, 1, 1], [], []>} : vector<128x17xf32>, vector<17x36xf32>, vector<128x36xf32> -> vector<128x36xf32>
    %c0_3 = arith.constant 0 : index
    %c0_4 = arith.constant 0 : index
    %3 = vector.load %arg3[%c0_3, %c0_4] : memref<36x4xf32, #tpu.memory_space<vmem>>, vector<36x4xf32>
    %cst_5 = arith.constant dense<0.000000e+00> : vector<128x4xf32>
    %4 = tpu.matmul %2, %3, %cst_5 {dimension_numbers = #tpu.dot_dimension_numbers<[1], [0], [0], [1], [0, 0, 1, 1], [], []>} : vector<128x36xf32>, vector<36x4xf32>, vector<128x4xf32> -> vector<128x4xf32>
    %c0_6 = arith.constant 0 : index
    %c0_7 = arith.constant 0 : index
    %5 = vector.load %arg6[%c0_6, %c0_7] : memref<128x4xf32, #tpu.memory_space<vmem>>, vector<128x4xf32>
    tpu.vector_store %arg6[%c0_6, %c0_7], %4 {strides = array<i32>} : memref<128x4xf32, #tpu.memory_space<vmem>>, vector<128x4xf32>,
    %c0_8 = arith.constant 0 : index
    %c0_9 = arith.constant 0 : index
    %6 = vector.load %arg4[%c0_8, %c0_9] : memref<4x36xf32, #tpu.memory_space<vmem>>, vector<4x36xf32>
    %cst_10 = arith.constant dense<0.000000e+00> : vector<4x128xf32>
    %7 = tpu.matmul %6, %2, %cst_10 {dimension_numbers = #tpu.dot_dimension_numbers<[1], [1], [0], [0], [0, 0, 1, 0], [], []>} : vector<4x36xf32>, vector<128x36xf32>, vector<4x128xf32> -> vector<4x128xf32>
    %c0_11 = arith.constant 0 : index
    %c0_12 = arith.constant 0 : index
    %8 = vector.load %arg7[%c0_11, %c0_12] : memref<4x128xf32, #tpu.memory_space<vmem>>, vector<4x128xf32>
    tpu.vector_store %arg7[%c0_11, %c0_12], %7 {strides = array<i32>} : memref<4x128xf32, #tpu.memory_space<vmem>>, vector<4x128xf32>,
    %9 = arith.truncf %2 : vector<128x36xf32> to vector<128x36xbf16>
    %c0_13 = arith.constant 0 : index
    %c0_14 = arith.constant 0 : index
    %10 = vector.load %arg5[%c0_13, %c0_14] : memref<128x36xbf16, #tpu.memory_space<vmem>>, vector<128x36xbf16>
    tpu.vector_store %arg5[%c0_13, %c0_14], %9 {strides = array<i32>} : memref<128x36xbf16, #tpu.memory_space<vmem>>, vector<128x36xbf16>,
    return
  }
  func.func @transform_0(%arg0: i32) -> (i32, i32) {
    %c0_i32 = arith.constant 0 : i32
    %c0_i32_0 = arith.constant 0 : i32
    return %arg0, %c0_i32 : i32, i32
  }
  func.func @transform_1(%arg0: i32) -> (i32, i32) {
    %c0_i32 = arith.constant 0 : i32
    %c0_i32_0 = arith.constant 0 : i32
    %c0_i32_1 = arith.constant 0 : i32
    return %c0_i32, %c0_i32_0 : i32, i32
  }
  func.func @transform_2(%arg0: i32) -> (i32, i32) {
    %c0_i32 = arith.constant 0 : i32
    %c0_i32_0 = arith.constant 0 : i32
    %c0_i32_1 = arith.constant 0 : i32
    return %c0_i32, %c0_i32_0 : i32, i32
  }
  func.func @transform_3(%arg0: i32) -> (i32, i32) {
    %c0_i32 = arith.constant 0 : i32
    %c0_i32_0 = arith.constant 0 : i32
    %c0_i32_1 = arith.constant 0 : i32
    return %c0_i32, %c0_i32_0 : i32, i32
  }
  func.func @transform_4(%arg0: i32) -> (i32, i32) {
    %c0_i32 = arith.constant 0 : i32
    %c0_i32_0 = arith.constant 0 : i32
    return %arg0, %c0_i32 : i32, i32
  }
  func.func @transform_5(%arg0: i32) -> (i32, i32) {
    %c0_i32 = arith.constant 0 : i32
    %c0_i32_0 = arith.constant 0 : i32
    return %arg0, %c0_i32 : i32, i32
  }
  func.func @transform_6(%arg0: i32) -> (i32, i32) {
    %c0_i32 = arith.constant 0 : i32
    %c0_i32_0 = arith.constant 0 : i32
    return %c0_i32, %arg0 : i32, i32
  }
}

</mosaic_0001>

<llo_original>
// kernel: tpu_custom_call.1
$region0: #{tpu_custom_call.1}
  #allocation0 [shape = 'u32[]', space=smem, size = 0x4, offset = 0x4, fixed_abs, tag = 'smem constant byte address 0x4 - core index']
  #allocation1 [shape = 'u32[144,128]{1,0:T(1,128)}', space=vmem, size = 0x12000, scoped, tag = 'internal scratch']
  %s0 = inlined_call_operand.vmem [shape: f32[128,17], index: 0, kind: input, shape index: {}]
  %s1 = inlined_call_operand.vmem [shape: f32[17,36], index: 1, kind: input, shape index: {}]
  %s2 = inlined_call_operand.vmem [shape: f32[36,4], index: 2, kind: input, shape index: {}]
  %s3 = inlined_call_operand.vmem [shape: f32[4,36], index: 3, kind: input, shape index: {}]
  %s4 = inlined_call_operand.vmem [shape: bf16[128,36], index: 4, kind: output, shape index: {0}]
  %s5 = inlined_call_operand.vmem [shape: f32[128,4], index: 5, kind: output, shape index: {1}]
  %s6 = inlined_call_operand.hbm [shape: f32[4,128], index: 6, kind: output, shape index: {2}]
  %7 = xla_tuple %s4, %s5, %s6
  %s8 = sld [smem:[#allocation0]]
  $region42: #{tpu_custom_call.1} parent=0
    _
  %s10 = ssub.s32 1, %s8
  %s11 = scalar_select 0, %s10, %s8
  $region1: #{tpu_custom_call.1} parent=0
    #allocation2 [shape = 'u8[2048]{0}', space=vmem, size = 0x800, scoped, tag = 'output window, operand 2, single buffered']
    #allocation3 [shape = 's32[1]{0}', space=sflag, size = 0x4, scoped, tag = 'scoped memory for tpu_custom_call.1']
    %12 = vsyncpa [#allocation3], 0
    // Predicated region
    $region2: #{tpu_custom_call.1} parent=1 // pred_check
      _
    $region3: #{tpu_custom_call.1} parent=1 // pred_check_branch
      %14 = sbr.rel (0) target = $region5
    $region4: #{tpu_custom_call.1} parent=1 // pred_region
      _
    $region5: #{tpu_custom_call.1} parent=1 // pred_fallthru
      _
    // Predicated region
    $region6: #{tpu_custom_call.1} parent=1 // pred_check
      _
    $region7: #{tpu_custom_call.1} parent=1 // pred_check_branch
      %16 = sbr.rel (0) target = $region9
    $region8: #{tpu_custom_call.1} parent=1 // pred_region
      _
    $region9: #{tpu_custom_call.1} parent=1 // pred_fallthru
      _
    // Predicated region
    $region10: #{tpu_custom_call.1} parent=1 // pred_check
      _
    $region11: #{tpu_custom_call.1} parent=1 // pred_check_branch
      %18 = sbr.rel (0) target = $region13
    $region12: #{tpu_custom_call.1} parent=1 // pred_region
      _
    $region13: #{tpu_custom_call.1} parent=1 // pred_fallthru
      _
    // Predicated region
    $region14: #{tpu_custom_call.1} parent=1 // pred_check
      _
    $region15: #{tpu_custom_call.1} parent=1 // pred_check_branch
      %20 = sbr.rel (0) target = $region17
    $region16: #{tpu_custom_call.1} parent=1 // pred_region
      _
    $region17: #{tpu_custom_call.1} parent=1 // pred_fallthru
      _
    %v21 = vld [vmem:[%s0] sm:$0xff]
    %v22 = vld [vmem:[%s0 + $0x8] sm:$0xff]
    %v23 = vld [vmem:[%s0 + $0x10] sm:$0xff]
    %v24 = vld [vmem:[%s0 + $0x18] sm:$0xff]
    %v25 = vld [vmem:[%s0 + $0x20] sm:$0xff]
    %v26 = vld [vmem:[%s0 + $0x28] sm:$0xff]
    %v27 = vld [vmem:[%s0 + $0x30] sm:$0xff]
    %v28 = vld [vmem:[%s0 + $0x38] sm:$0xff]
    %v29 = vld [vmem:[%s0 + $0x40] sm:$0xff]
    %v30 = vld [vmem:[%s0 + $0x48] sm:$0xff]
    %v31 = vld [vmem:[%s0 + $0x50] sm:$0xff]
    %v32 = vld [vmem:[%s0 + $0x58] sm:$0xff]
    %v33 = vld [vmem:[%s0 + $0x60] sm:$0xff]
    %v34 = vld [vmem:[%s0 + $0x68] sm:$0xff]
    %v35 = vld [vmem:[%s0 + $0x70] sm:$0xff]
    %v36 = vld [vmem:[%s0 + $0x78] sm:$0xff]
    %v37 = vld [vmem:[%s1] sm:$0xff]
    %v38 = vld [vmem:[%s1 + $0x8] sm:$0xff]
    %v39 = vld [vmem:[%s1 + $0x10] sm:$0x1]
    %vm40 = vcmask 138240
    %v42 = vsel %vm40, %v21, 0
    %v45 = vsel %vm40, %v22, 0
    %v48 = vsel %vm40, %v23, 0
    %v51 = vsel %vm40, %v24, 0
    %v54 = vsel %vm40, %v25, 0
    %v57 = vsel %vm40, %v26, 0
    %v60 = vsel %vm40, %v27, 0
    %v63 = vsel %vm40, %v28, 0
    %v66 = vsel %vm40, %v29, 0
    %v69 = vsel %vm40, %v30, 0
    %v72 = vsel %vm40, %v31, 0
    %v75 = vsel %vm40, %v32, 0
    %v78 = vsel %vm40, %v33, 0
    %v81 = vsel %vm40, %v34, 0
    %v84 = vsel %vm40, %v35, 0
    %v87 = vsel %vm40, %v36, 0
    %vm89 = vcmask 1040384
    %v91 = vsel %vm89, %v39, 0
    %93 = vmatprep.subr.mxu0 0.0
    %94 = vmatpush1.msra.mxu0 0.0
    %95 = vmatprep.subr.mxu0 0.0
    %96 = vmatpush1.msra.mxu0 0.0
    %97 = vmatprep.subr.mxu0 0.0
    %98 = vmatpush1.msra.mxu0 0.0
    %99 = vmatprep.subr.mxu0 0.0
    %100 = vmatpush1.msra.mxu0 0.0
    %101 = vmatprep.subr.mxu0 0.0
    %102 = vmatpush1.msra.mxu0 0.0
    %103 = vmatprep.subr.mxu0 0.0
    %104 = vmatpush1.msra.mxu0 0.0
    %105 = vmatprep.subr.mxu0 0.0
    %106 = vmatpush1.msra.mxu0 0.0
    %107 = vmatprep.subr.mxu0 0.0
    %108 = vmatpush1.msra.mxu0 0.0
    %109 = vmatprep.subr.mxu0 0.0
    %110 = vmatpush1.msra.mxu0 0.0
    %111 = vmatprep.subr.mxu0 0.0
    %112 = vmatpush1.msra.mxu0 0.0
    %113 = vmatprep.subr.mxu0 0.0
    %114 = vmatpush1.msra.mxu0 0.0
    %115 = vmatprep.subr.mxu0 0.0
    %116 = vmatpush1.msra.mxu0 0.0
    %117 = vmatprep.subr.mxu0 0.0
    %118 = vmatpush1.msra.mxu0 0.0
    %119 = vmatprep.subr.mxu0 0.0
    %120 = vmatpush1.msra.mxu0 %v91
    %121 = vmatprep.subr.mxu0 0.0
    %122 = vmatpush1.msra.mxu0 %v38
    %123 = vmatprep.subr.mxu0 0.0
    %124 = vmatpush1.msra.mxu0 %v37
    %125 = vmatprep.subr.mxu0 0.0
    %126 = vmatpush2.msra.mxu0 0.0
    %127 = vmatprep.subr.mxu0 0.0
    %128 = vmatpush2.msra.mxu0 0.0
    %129 = vmatprep.subr.mxu0 0.0
    %130 = vmatpush2.msra.mxu0 0.0
    %131 = vmatprep.subr.mxu0 0.0
    %132 = vmatpush2.msra.mxu0 0.0
    %133 = vmatprep.subr.mxu0 0.0
    %134 = vmatpush2.msra.mxu0 0.0
    %135 = vmatprep.subr.mxu0 0.0
    %136 = vmatpush2.msra.mxu0 0.0
    %137 = vmatprep.subr.mxu0 0.0
    %138 = vmatpush2.msra.mxu0 0.0
    %139 = vmatprep.subr.mxu0 0.0
    %140 = vmatpush2.msra.mxu0 0.0
    %141 = vmatprep.subr.mxu0 0.0
    %142 = vmatpush2.msra.mxu0 0.0
    %143 = vmatprep.subr.mxu0 0.0
    %144 = vmatpush2.msra.mxu0 0.0
    %145 = vmatprep.subr.mxu0 0.0
    %146 = vmatpush2.msra.mxu0 0.0
    %147 = vmatprep.subr.mxu0 0.0
    %148 = vmatpush2.msra.mxu0 0.0
    %149 = vmatprep.subr.mxu0 0.0
    %150 = vmatpush2.msra.mxu0 0.0
    %151 = vmatprep.subr.mxu0 0.0
    %152 = vmatpush2.msra.mxu0 0.0
    %153 = vmatprep.subr.mxu0 0.0
    %154 = vmatpush2.msra.mxu0 0.0
    %155 = vmatprep.subr.mxu0 0.0
    %156 = vmatpush2.msra.mxu0 0.0
    %157 = vmatprep.mubr.f32.mxu0 0.0
    %158 = vmatmul.mubr.f32.gmra.mxu0 %v42
    %v159 = vpop.f32.mrf.mxu0
    %v160 = vadd.f32 0.0, %v159
    %v161 = vpop.f32.mrf.mxu0
    %162 = vmatprep.mubr.f32.mxu0 0.0
    %163 = vmatmul.mubr.f32.gmra.mxu0 %v45
    %v164 = vpop.f32.mrf.mxu0
    %v165 = vadd.f32 0.0, %v164
    %v166 = vpop.f32.mrf.mxu0
    %167 = vmatprep.mubr.f32.mxu0 0.0
    %168 = vmatmul.mubr.f32.gmra.mxu0 %v48
    %v169 = vpop.f32.mrf.mxu0
    %v170 = vadd.f32 0.0, %v169
    %v171 = vpop.f32.mrf.mxu0
    %172 = vmatprep.mubr.f32.mxu0 0.0
    %173 = vmatmul.mubr.f32.gmra.mxu0 %v51
    %v174 = vpop.f32.mrf.mxu0
    %v175 = vadd.f32 0.0, %v174
    %v176 = vpop.f32.mrf.mxu0
    %177 = vmatprep.mubr.f32.mxu0 0.0
    %178 = vmatmul.mubr.f32.gmra.mxu0 %v54
    %v179 = vpop.f32.mrf.mxu0
    %v180 = vadd.f32 0.0, %v179
    %v181 = vpop.f32.mrf.mxu0
    %182 = vmatprep.mubr.f32.mxu0 0.0
    %183 = vmatmul.mubr.f32.gmra.mxu0 %v57
    %v184 = vpop.f32.mrf.mxu0
    %v185 = vadd.f32 0.0, %v184
    %v186 = vpop.f32.mrf.mxu0
    %187 = vmatprep.mubr.f32.mxu0 0.0
    %188 = vmatmul.mubr.f32.gmra.mxu0 %v60
    %v189 = vpop.f32.mrf.mxu0
    %v190 = vadd.f32 0.0, %v189
    %v191 = vpop.f32.mrf.mxu0
    %192 = vmatprep.mubr.f32.mxu0 0.0
    %193 = vmatmul.mubr.f32.gmra.mxu0 %v63
    %v194 = vpop.f32.mrf.mxu0
    %v195 = vadd.f32 0.0, %v194
    %v196 = vpop.f32.mrf.mxu0
    %197 = vmatprep.mubr.f32.mxu0 0.0
    %198 = vmatmul.mubr.f32.gmra.mxu0 %v66
    %v199 = vpop.f32.mrf.mxu0
    %v200 = vadd.f32 0.0, %v199
    %v201 = vpop.f32.mrf.mxu0
    %202 = vmatprep.mubr.f32.mxu0 0.0
    %203 = vmatmul.mubr.f32.gmra.mxu0 %v69
    %v204 = vpop.f32.mrf.mxu0
    %v205 = vadd.f32 0.0, %v204
    %v206 = vpop.f32.mrf.mxu0
    %207 = vmatprep.mubr.f32.mxu0 0.0
    %208 = vmatmul.mubr.f32.gmra.mxu0 %v72
    %v209 = vpop.f32.mrf.mxu0
    %v210 = vadd.f32 0.0, %v209
    %v211 = vpop.f32.mrf.mxu0
    %212 = vmatprep.mubr.f32.mxu0 0.0
    %213 = vmatmul.mubr.f32.gmra.mxu0 %v75
    %v214 = vpop.f32.mrf.mxu0
    %v215 = vadd.f32 0.0, %v214
    %v216 = vpop.f32.mrf.mxu0
    %217 = vmatprep.mubr.f32.mxu0 0.0
    %218 = vmatmul.mubr.f32.gmra.mxu0 %v78
    %v219 = vpop.f32.mrf.mxu0
    %v220 = vadd.f32 0.0, %v219
    %v221 = vpop.f32.mrf.mxu0
    %222 = vmatprep.mubr.f32.mxu0 0.0
    %223 = vmatmul.mubr.f32.gmra.mxu0 %v81
    %v224 = vpop.f32.mrf.mxu0
    %v225 = vadd.f32 0.0, %v224
    %v226 = vpop.f32.mrf.mxu0
    %227 = vmatprep.mubr.f32.mxu0 0.0
    %228 = vmatmul.mubr.f32.gmra.mxu0 %v84
    %v229 = vpop.f32.mrf.mxu0
    %v230 = vadd.f32 0.0, %v229
    %v231 = vpop.f32.mrf.mxu0
    %232 = vmatprep.mubr.f32.mxu0 0.0
    %233 = vmatmul.mubr.f32.gmra.mxu0 %v87
    %v234 = vpop.f32.mrf.mxu0
    %v235 = vadd.f32 0.0, %v234
    %v236 = vpop.f32.mrf.mxu0
    %237 = vdwg.mxu0
    %v238 = vld [vmem:[%s2] sm:$0xff]
    %v239 = vld [vmem:[%s2 + $0x8] sm:$0xff]
    %v240 = vld [vmem:[%s2 + $0x10] sm:$0xff]
    %v241 = vld [vmem:[%s2 + $0x18] sm:$0xff]
    %v242 = vld [vmem:[%s2 + $0x20] sm:$0xf]
    %vm243 = vcmask 293888
    %v245 = vsel %vm243, %v160, 0
    %v248 = vsel %vm243, %v165, 0
    %v251 = vsel %vm243, %v170, 0
    %v254 = vsel %vm243, %v175, 0
    %v257 = vsel %vm243, %v180, 0
    %v260 = vsel %vm243, %v185, 0
    %v263 = vsel %vm243, %v190, 0
    %v266 = vsel %vm243, %v195, 0
    %v269 = vsel %vm243, %v200, 0
    %v272 = vsel %vm243, %v205, 0
    %v275 = vsel %vm243, %v210, 0
    %v278 = vsel %vm243, %v215, 0
    %v281 = vsel %vm243, %v220, 0
    %v284 = vsel %vm243, %v225, 0
    %v287 = vsel %vm243, %v230, 0
    %v290 = vsel %vm243, %v235, 0
    %vm292 = vcmask 1043456
    %v294 = vsel %vm292, %v242, 0
    %296 = vmatprep.subr.mxu0 0.0
    %297 = vmatpush1.msra.mxu0 0.0
    %298 = vmatprep.subr.mxu0 0.0
    %299 = vmatpush1.msra.mxu0 0.0
    %300 = vmatprep.subr.mxu0 0.0
    %301 = vmatpush1.msra.mxu0 0.0
    %302 = vmatprep.subr.mxu0 0.0
    %303 = vmatpush1.msra.mxu0 0.0
    %304 = vmatprep.subr.mxu0 0.0
    %305 = vmatpush1.msra.mxu0 0.0
    %306 = vmatprep.subr.mxu0 0.0
    %307 = vmatpush1.msra.mxu0 0.0
    %308 = vmatprep.subr.mxu0 0.0
    %309 = vmatpush1.msra.mxu0 0.0
    %310 = vmatprep.subr.mxu0 0.0
    %311 = vmatpush1.msra.mxu0 0.0
    %312 = vmatprep.subr.mxu0 0.0
    %313 = vmatpush1.msra.mxu0 0.0
    %314 = vmatprep.subr.mxu0 0.0
    %315 = vmatpush1.msra.mxu0 0.0
    %316 = vmatprep.subr.mxu0 0.0
    %317 = vmatpush1.msra.mxu0 0.0
    %318 = vmatprep.subr.mxu0 0.0
    %319 = vmatpush1.msra.mxu0 %v294
    %320 = vmatprep.subr.mxu0 0.0
    %321 = vmatpush1.msra.mxu0 %v241
    %322 = vmatprep.subr.mxu0 0.0
    %323 = vmatpush1.msra.mxu0 %v240
    %324 = vmatprep.subr.mxu0 0.0
    %325 = vmatpush1.msra.mxu0 %v239
    %326 = vmatprep.subr.mxu0 0.0
    %327 = vmatpush1.msra.mxu0 %v238
    %328 = vmatprep.subr.mxu0 0.0
    %329 = vmatpush2.msra.mxu0 0.0
    %330 = vmatprep.subr.mxu0 0.0
    %331 = vmatpush2.msra.mxu0 0.0
    %332 = vmatprep.subr.mxu0 0.0
    %333 = vmatpush2.msra.mxu0 0.0
    %334 = vmatprep.subr.mxu0 0.0
    %335 = vmatpush2.msra.mxu0 0.0
    %336 = vmatprep.subr.mxu0 0.0
    %337 = vmatpush2.msra.mxu0 0.0
    %338 = vmatprep.subr.mxu0 0.0
    %339 = vmatpush2.msra.mxu0 0.0
    %340 = vmatprep.subr.mxu0 0.0
    %341 = vmatpush2.msra.mxu0 0.0
    %342 = vmatprep.subr.mxu0 0.0
    %343 = vmatpush2.msra.mxu0 0.0
    %344 = vmatprep.subr.mxu0 0.0
    %345 = vmatpush2.msra.mxu0 0.0
    %346 = vmatprep.subr.mxu0 0.0
    %347 = vmatpush2.msra.mxu0 0.0
    %348 = vmatprep.subr.mxu0 0.0
    %349 = vmatpush2.msra.mxu0 0.0
    %350 = vmatprep.subr.mxu0 0.0
    %351 = vmatpush2.msra.mxu0 0.0
    %352 = vmatprep.subr.mxu0 0.0
    %353 = vmatpush2.msra.mxu0 0.0
    %354 = vmatprep.subr.mxu0 0.0
    %355 = vmatpush2.msra.mxu0 0.0
    %356 = vmatprep.subr.mxu0 0.0
    %357 = vmatpush2.msra.mxu0 0.0
    %358 = vmatprep.subr.mxu0 0.0
    %359 = vmatpush2.msra.mxu0 0.0
    %360 = vmatprep.mubr.f32.mxu0 0.0
    %361 = vmatmul.mubr.f32.gmra.mxu0 %v245
    %v362 = vpop.f32.mrf.mxu0
    %v363 = vadd.f32 0.0, %v362
    %v364 = vpop.f32.mrf.mxu0
    %365 = vmatprep.mubr.f32.mxu0 0.0
    %366 = vmatmul.mubr.f32.gmra.mxu0 %v248
    %v367 = vpop.f32.mrf.mxu0
    %v368 = vadd.f32 0.0, %v367
    %v369 = vpop.f32.mrf.mxu0
    %370 = vmatprep.mubr.f32.mxu0 0.0
    %371 = vmatmul.mubr.f32.gmra.mxu0 %v251
    %v372 = vpop.f32.mrf.mxu0
    %v373 = vadd.f32 0.0, %v372
    %v374 = vpop.f32.mrf.mxu0
    %375 = vmatprep.mubr.f32.mxu0 0.0
    %376 = vmatmul.mubr.f32.gmra.mxu0 %v254
    %v377 = vpop.f32.mrf.mxu0
    %v378 = vadd.f32 0.0, %v377
    %v379 = vpop.f32.mrf.mxu0
    %380 = vmatprep.mubr.f32.mxu0 0.0
    %381 = vmatmul.mubr.f32.gmra.mxu0 %v257
    %v382 = vpop.f32.mrf.mxu0
    %v383 = vadd.f32 0.0, %v382
    %v384 = vpop.f32.mrf.mxu0
    %385 = vmatprep.mubr.f32.mxu0 0.0
    %386 = vmatmul.mubr.f32.gmra.mxu0 %v260
    %v387 = vpop.f32.mrf.mxu0
    %v388 = vadd.f32 0.0, %v387
    %v389 = vpop.f32.mrf.mxu0
    %390 = vmatprep.mubr.f32.mxu0 0.0
    %391 = vmatmul.mubr.f32.gmra.mxu0 %v263
    %v392 = vpop.f32.mrf.mxu0
    %v393 = vadd.f32 0.0, %v392
    %v394 = vpop.f32.mrf.mxu0
    %395 = vmatprep.mubr.f32.mxu0 0.0
    %396 = vmatmul.mubr.f32.gmra.mxu0 %v266
    %v397 = vpop.f32.mrf.mxu0
    %v398 = vadd.f32 0.0, %v397
    %v399 = vpop.f32.mrf.mxu0
    %400 = vmatprep.mubr.f32.mxu0 0.0
    %401 = vmatmul.mubr.f32.gmra.mxu0 %v269
    %v402 = vpop.f32.mrf.mxu0
    %v403 = vadd.f32 0.0, %v402
    %v404 = vpop.f32.mrf.mxu0
    %405 = vmatprep.mubr.f32.mxu0 0.0
    %406 = vmatmul.mubr.f32.gmra.mxu0 %v272
    %v407 = vpop.f32.mrf.mxu0
    %v408 = vadd.f32 0.0, %v407
    %v409 = vpop.f32.mrf.mxu0
    %410 = vmatprep.mubr.f32.mxu0 0.0
    %411 = vmatmul.mubr.f32.gmra.mxu0 %v275
    %v412 = vpop.f32.mrf.mxu0
    %v413 = vadd.f32 0.0, %v412
    %v414 = vpop.f32.mrf.mxu0
    %415 = vmatprep.mubr.f32.mxu0 0.0
    %416 = vmatmul.mubr.f32.gmra.mxu0 %v278
    %v417 = vpop.f32.mrf.mxu0
    %v418 = vadd.f32 0.0, %v417
    %v419 = vpop.f32.mrf.mxu0
    %420 = vmatprep.mubr.f32.mxu0 0.0
    %421 = vmatmul.mubr.f32.gmra.mxu0 %v281
    %v422 = vpop.f32.mrf.mxu0
    %v423 = vadd.f32 0.0, %v422
    %v424 = vpop.f32.mrf.mxu0
    %425 = vmatprep.mubr.f32.mxu0 0.0
    %426 = vmatmul.mubr.f32.gmra.mxu0 %v284
    %v427 = vpop.f32.mrf.mxu0
    %v428 = vadd.f32 0.0, %v427
    %v429 = vpop.f32.mrf.mxu0
    %430 = vmatprep.mubr.f32.mxu0 0.0
    %431 = vmatmul.mubr.f32.gmra.mxu0 %v287
    %v432 = vpop.f32.mrf.mxu0
    %v433 = vadd.f32 0.0, %v432
    %v434 = vpop.f32.mrf.mxu0
    %435 = vmatprep.mubr.f32.mxu0 0.0
    %436 = vmatmul.mubr.f32.gmra.mxu0 %v290
    %v437 = vpop.f32.mrf.mxu0
    %v438 = vadd.f32 0.0, %v437
    %v439 = vpop.f32.mrf.mxu0
    %440 = vdwg.mxu0
    %vm441 = vcmask 31744
    %442 = vst.msk [vmem:[%s5] sm:$0xff] %vm441, %v363
    %443 = vst.msk [vmem:[%s5 + $0x8] sm:$0xff] %vm441, %v368
    %444 = vst.msk [vmem:[%s5 + $0x10] sm:$0xff] %vm441, %v373
    %445 = vst.msk [vmem:[%s5 + $0x18] sm:$0xff] %vm441, %v378
    %446 = vst.msk [vmem:[%s5 + $0x20] sm:$0xff] %vm441, %v383
    %447 = vst.msk [vmem:[%s5 + $0x28] sm:$0xff] %vm441, %v388
    %448 = vst.msk [vmem:[%s5 + $0x30] sm:$0xff] %vm441, %v393
    %449 = vst.msk [vmem:[%s5 + $0x38] sm:$0xff] %vm441, %v398
    %450 = vst.msk [vmem:[%s5 + $0x40] sm:$0xff] %vm441, %v403
    %451 = vst.msk [vmem:[%s5 + $0x48] sm:$0xff] %vm441, %v408
    %452 = vst.msk [vmem:[%s5 + $0x50] sm:$0xff] %vm441, %v413
    %453 = vst.msk [vmem:[%s5 + $0x58] sm:$0xff] %vm441, %v418
    %454 = vst.msk [vmem:[%s5 + $0x60] sm:$0xff] %vm441, %v423
    %455 = vst.msk [vmem:[%s5 + $0x68] sm:$0xff] %vm441, %v428
    %456 = vst.msk [vmem:[%s5 + $0x70] sm:$0xff] %vm441, %v433
    %457 = vst.msk [vmem:[%s5 + $0x78] sm:$0xff] %vm441, %v438
    %v458 = vld [vmem:[%s3] sm:$0xf]
    %v460 = vsel %vm243, %v458, 0
    %462 = vmatprep.subr.mxu0 0.0
    %463 = vmatpush1.xpose.msra.mxu0 %v290
    %464 = vmatprep.subr.mxu0 0.0
    %465 = vmatpush1.xpose.msra.mxu0 %v287
    %466 = vmatprep.subr.mxu0 0.0
    %467 = vmatpush1.xpose.msra.mxu0 %v284
    %468 = vmatprep.subr.mxu0 0.0
    %469 = vmatpush1.xpose.msra.mxu0 %v281
    %470 = vmatprep.subr.mxu0 0.0
    %471 = vmatpush1.xpose.msra.mxu0 %v278
    %472 = vmatprep.subr.mxu0 0.0
    %473 = vmatpush1.xpose.msra.mxu0 %v275
    %474 = vmatprep.subr.mxu0 0.0
    %475 = vmatpush1.xpose.msra.mxu0 %v272
    %476 = vmatprep.subr.mxu0 0.0
    %477 = vmatpush1.xpose.msra.mxu0 %v269
    %478 = vmatprep.subr.mxu0 0.0
    %479 = vmatpush1.xpose.msra.mxu0 %v266
    %480 = vmatprep.subr.mxu0 0.0
    %481 = vmatpush1.xpose.msra.mxu0 %v263
    %482 = vmatprep.subr.mxu0 0.0
    %483 = vmatpush1.xpose.msra.mxu0 %v260
    %484 = vmatprep.subr.mxu0 0.0
    %485 = vmatpush1.xpose.msra.mxu0 %v257
    %486 = vmatprep.subr.mxu0 0.0
    %487 = vmatpush1.xpose.msra.mxu0 %v254
    %488 = vmatprep.subr.mxu0 0.0
    %489 = vmatpush1.xpose.msra.mxu0 %v251
    %490 = vmatprep.subr.mxu0 0.0
    %491 = vmatpush1.xpose.msra.mxu0 %v248
    %492 = vmatprep.subr.mxu0 0.0
    %493 = vmatpush1.xpose.msra.mxu0 %v245
    %494 = vmatprep.subr.mxu0 0.0
    %495 = vmatpush2.xpose.msra.mxu0 0.0
    %496 = vmatprep.subr.mxu0 0.0
    %497 = vmatpush2.xpose.msra.mxu0 0.0
    %498 = vmatprep.subr.mxu0 0.0
    %499 = vmatpush2.xpose.msra.mxu0 0.0
    %500 = vmatprep.subr.mxu0 0.0
    %501 = vmatpush2.xpose.msra.mxu0 0.0
    %502 = vmatprep.subr.mxu0 0.0
    %503 = vmatpush2.xpose.msra.mxu0 0.0
    %504 = vmatprep.subr.mxu0 0.0
    %505 = vmatpush2.xpose.msra.mxu0 0.0
    %506 = vmatprep.subr.mxu0 0.0
    %507 = vmatpush2.xpose.msra.mxu0 0.0
    %508 = vmatprep.subr.mxu0 0.0
    %509 = vmatpush2.xpose.msra.mxu0 0.0
    %510 = vmatprep.subr.mxu0 0.0
    %511 = vmatpush2.xpose.msra.mxu0 0.0
    %512 = vmatprep.subr.mxu0 0.0
    %513 = vmatpush2.xpose.msra.mxu0 0.0
    %514 = vmatprep.subr.mxu0 0.0
    %515 = vmatpush2.xpose.msra.mxu0 0.0
    %516 = vmatprep.subr.mxu0 0.0
    %517 = vmatpush2.xpose.msra.mxu0 0.0
    %518 = vmatprep.subr.mxu0 0.0
    %519 = vmatpush2.xpose.msra.mxu0 0.0
    %520 = vmatprep.subr.mxu0 0.0
    %521 = vmatpush2.xpose.msra.mxu0 0.0
    %522 = vmatprep.subr.mxu0 0.0
    %523 = vmatpush2.xpose.msra.mxu0 0.0
    %524 = vmatprep.subr.mxu0 0.0
    %525 = vmatpush2.xpose.msra.mxu0 0.0
    %526 = vmatprep.mubr.f32.mxu0 0.0
    %527 = vmatmul.mubr.f32.gmra.mxu0 %v460
    %v528 = vpop.f32.mrf.mxu0
    %v529 = vadd.f32 0.0, %v528
    %v530 = vpop.f32.mrf.mxu0
    %531 = vdwg.mxu0
    %532 = vst [vmem:[#allocation2] sm:$0xf] %v529
    %v533 = vpack.c.bf16 %v165, %v160
    %v534 = vpack.c.bf16 %v175, %v170
    %v535 = vpack.c.bf16 %v185, %v180
    %v536 = vpack.c.bf16 %v195, %v190
    %v537 = vpack.c.bf16 %v205, %v200
    %v538 = vpack.c.bf16 %v215, %v210
    %v539 = vpack.c.bf16 %v225, %v220
    %v540 = vpack.c.bf16 %v235, %v230
    %v549 = vunpack.c.l.b16 %v533
    %v550 = vunpack.c.h.b16 %v533
    %v551 = vunpack.c.l.b16 %v534
    %v552 = vunpack.c.h.b16 %v534
    %v553 = vunpack.c.l.b16 %v535
    %v554 = vunpack.c.h.b16 %v535
    %v555 = vunpack.c.l.b16 %v536
    %v556 = vunpack.c.h.b16 %v536
    %v557 = vunpack.c.l.b16 %v537
    %v558 = vunpack.c.h.b16 %v537
    %v559 = vunpack.c.l.b16 %v538
    %v560 = vunpack.c.h.b16 %v538
    %v561 = vunpack.c.l.b16 %v539
    %v562 = vunpack.c.h.b16 %v539
    %v563 = vunpack.c.l.b16 %v540
    %v564 = vunpack.c.h.b16 %v540
    %v565 = vpack.c.b16 %v549, %v549
    %v566 = vpack.c.b16 %v550, %v550
    %v567 = vpack.c.b16 %v551, %v551
    %v568 = vpack.c.b16 %v552, %v552
    %v569 = vpack.c.b16 %v553, %v553
    %v570 = vpack.c.b16 %v554, %v554
    %v571 = vpack.c.b16 %v555, %v555
    %v572 = vpack.c.b16 %v556, %v556
    %v573 = vpack.c.b16 %v557, %v557
    %v574 = vpack.c.b16 %v558, %v558
    %v575 = vpack.c.b16 %v559, %v559
    %v576 = vpack.c.b16 %v560, %v560
    %v577 = vpack.c.b16 %v561, %v561
    %v578 = vpack.c.b16 %v562, %v562
    %v579 = vpack.c.b16 %v563, %v563
    %v580 = vpack.c.b16 %v564, %v564
    %vm597 = vcmask 289792
    %598 = vst.msk [vmem:[%s4] sm:$0xf] %vm597, %v565
    %599 = vst.msk [vmem:[%s4 + $0x4] sm:$0xf] %vm597, %v566
    %600 = vst.msk [vmem:[%s4 + $0x8] sm:$0xf] %vm597, %v567
    %601 = vst.msk [vmem:[%s4 + $0xc] sm:$0xf] %vm597, %v568
    %602 = vst.msk [vmem:[%s4 + $0x10] sm:$0xf] %vm597, %v569
    %603 = vst.msk [vmem:[%s4 + $0x14] sm:$0xf] %vm597, %v570
    %604 = vst.msk [vmem:[%s4 + $0x18] sm:$0xf] %vm597, %v571
    %605 = vst.msk [vmem:[%s4 + $0x1c] sm:$0xf] %vm597, %v572
    %606 = vst.msk [vmem:[%s4 + $0x20] sm:$0xf] %vm597, %v573
    %607 = vst.msk [vmem:[%s4 + $0x24] sm:$0xf] %vm597, %v574
    %608 = vst.msk [vmem:[%s4 + $0x28] sm:$0xf] %vm597, %v575
    %609 = vst.msk [vmem:[%s4 + $0x2c] sm:$0xf] %vm597, %v576
    %610 = vst.msk [vmem:[%s4 + $0x30] sm:$0xf] %vm597, %v577
    %611 = vst.msk [vmem:[%s4 + $0x34] sm:$0xf] %vm597, %v578
    %612 = vst.msk [vmem:[%s4 + $0x38] sm:$0xf] %vm597, %v579
    %613 = vst.msk [vmem:[%s4 + $0x3c] sm:$0xf] %vm597, %v580
    // Predicated region
    $region18: #{tpu_custom_call.1} parent=1 // pred_check
      _
    $region19: #{tpu_custom_call.1} parent=1 // pred_check_branch
      %615 = sbr.rel (0) target = $region21
    $region20: #{tpu_custom_call.1} parent=1 // pred_region
      _
    $region21: #{tpu_custom_call.1} parent=1 // pred_fallthru
      _
    // Predicated region
    $region22: #{tpu_custom_call.1} parent=1 // pred_check
      _
    $region23: #{tpu_custom_call.1} parent=1 // pred_check_branch
      %617 = sbr.rel (0) target = $region25
    $region24: #{tpu_custom_call.1} parent=1 // pred_region
      _
    $region25: #{tpu_custom_call.1} parent=1 // pred_fallthru
      _
    // Predicated region
    $region26: #{tpu_custom_call.1} parent=1 // pred_check
      _
    $region27: #{tpu_custom_call.1} parent=1 // pred_check_branch
      %619 = sbr.rel (0) target = $region29
    $region28: #{tpu_custom_call.1} parent=1 // pred_region
      %s621 = ssub.s32 64, 64
      %622 = vsyncadd [#allocation3], %s621
      %s624 = sshll.u32 [#allocation2], 4
      %s625 = int_to_ptr.vmem [resolvable:$true] %s624
      %627 = dma.vmem_to_hbm [thread:$0]  %s625, 64, %s6, [#allocation3]
    $region29: #{tpu_custom_call.1} parent=1 // pred_fallthru
      _
    // Predicated region
    $region30: #{tpu_custom_call.1} parent=1 // pred_check
      _
    $region31: #{tpu_custom_call.1} parent=1 // pred_check_branch
      %629 = sbr.rel (0) target = $region33
    $region32: #{tpu_custom_call.1} parent=1 // pred_region
      _
    $region33: #{tpu_custom_call.1} parent=1 // pred_fallthru
      _
    // Predicated region
    $region34: #{tpu_custom_call.1} parent=1 // pred_check
      _
    $region35: #{tpu_custom_call.1} parent=1 // pred_check_branch
      %631 = sbr.rel (0) target = $region37
    $region36: #{tpu_custom_call.1} parent=1 // pred_region
      _
    $region37: #{tpu_custom_call.1} parent=1 // pred_fallthru
      _
    // Predicated region
    $region38: #{tpu_custom_call.1} parent=1 // pred_check
      _
    $region39: #{tpu_custom_call.1} parent=1 // pred_check_branch
      %633 = sbr.rel (0) target = $region41
    $region40: #{tpu_custom_call.1} parent=1 // pred_region
      %634 = dma.done [#allocation3], 64
    $region41: #{tpu_custom_call.1} parent=1 // pred_fallthru
      _
    %635 = vsyncpa [#allocation3], 1

</llo_original>
